<compile_context>
chip_gen: v5e
topology: v5e:2x2
jax: 0.10.0
libtpu: 0.0.40
codegen_flags: <defaults>
</compile_context>

<pallas_src>
import jax
import jax.numpy as jnp
from jax import lax
from jax.experimental import pallas as pl
from jax.experimental.pallas import tpu as pltpu


def _leaky_relu(x, slope=0.2):
    return jnp.where(x > 0, x, slope * x)


def _round_up(n, m):
    return ((n + m - 1) // m) * m


def zdisc_kernel(x_ref, w1t_ref, w2t_ref, small_ref, out_ref):
    # x tile: (Bt, Z) f32 -> bf16 operands for the MXU; accumulate in f32.
    x = x_ref[...].astype(jnp.bfloat16)

    b1 = small_ref[0:1, :]                        # (1, d) f32
    b2 = small_ref[1:2, :]                        # (1, d) f32
    w3 = small_ref[2:3, :].astype(jnp.bfloat16)   # (1, d) bf16
    b3 = small_ref[3:4, 0:1]                      # (1, 1) f32

    # linear1 + leaky_relu: (Bt, Z) @ (Z, d) -> (Bt, d); weight pre-transposed.
    h1 = jnp.dot(x, w1t_ref[...], preferred_element_type=jnp.float32) + b1
    h1 = _leaky_relu(h1)

    # linear2 + leaky_relu: (Bt, d) @ (d, d) -> (Bt, d); weight pre-transposed.
    h2 = jnp.dot(h1.astype(jnp.bfloat16), w2t_ref[...],
                 preferred_element_type=jnp.float32) + b2
    h2 = _leaky_relu(h2)

    # linear3 + sigmoid, lane-dense: contract (1, d) with (Bt, d) over d
    # -> (1, Bt), i.e. batch lands in the lane axis of the output tile.
    logit = lax.dot_general(
        w3, h2.astype(jnp.bfloat16),
        dimension_numbers=(((1,), (1,)), ((), ())),
        preferred_element_type=jnp.float32,
    ) + b3
    out_ref[...] = jax.nn.sigmoid(logit)


def prepare_params(w1, b1, w2, b2, w3, b3):
    """One-time (init-time) parameter prep from native PyTorch layouts:
    pre-transpose + bf16-cast the two big weights and pack the tiny tensors
    (b1, b2, w3-row, b3) into a single (4, d) f32 array."""
    d = w1.shape[0]
    w1t = jnp.asarray(w1, jnp.float32).T.astype(jnp.bfloat16)   # (Z, d)
    w2t = jnp.asarray(w2, jnp.float32).T.astype(jnp.bfloat16)   # (d, d)
    small = jnp.stack([
        jnp.asarray(b1, jnp.float32),
        jnp.asarray(b2, jnp.float32),
        jnp.asarray(w3, jnp.float32)[0],
        jnp.pad(jnp.asarray(b3, jnp.float32), (0, d - 1)),
    ])                                                           # (4, d) f32
    return w1t, w2t, small


def zdiscriminator(x, w1t, w2t, small):
    """x: (B, z_size) f32. w1t (Z, d) bf16, w2t (d, d) bf16, small (4, d) f32
    as produced by prepare_params. Returns (B, 1) f32."""
    B, Z = x.shape
    d = w2t.shape[0]

    # Batch tile: 256 rows per grid step for large B (fills the v6e/v7x MXU M
    # dimension); otherwise one tile rounded up to the 8-sublane granule.
    Bt = 256 if B > 256 else _round_up(B, 8)
    B_pad = _round_up(B, Bt)
    if B_pad != B:
        x = jnp.pad(x, ((0, B_pad - B), (0, 0)))

    out = pl.pallas_call(
        zdisc_kernel,
        out_shape=jax.ShapeDtypeStruct((1, B_pad), jnp.float32),
        grid=(B_pad // Bt,),
        in_specs=[
            pl.BlockSpec((Bt, Z), lambda i: (i, 0)),   # x: tiled over batch
            pl.BlockSpec((Z, d), lambda i: (0, 0)),    # w1t: grid-invariant
            pl.BlockSpec((d, d), lambda i: (0, 0)),    # w2t: grid-invariant
            pl.BlockSpec((4, d), lambda i: (0, 0)),    # packed b1/b2/w3/b3
        ],
        out_specs=pl.BlockSpec((1, Bt), lambda i: (0, i)),  # lane-dense logits
        compiler_params=pltpu.CompilerParams(
            dimension_semantics=("parallel",)),
    )(x, w1t, w2t, small)

    # (1, B_pad) -> (B, 1): metadata-only reshape, then drop padded rows.
    return out.reshape(B_pad, 1)[:B]


def zdiscriminator_ref(x, w1, b1, w2, b2, w3, b3):
    """Pure-JAX f32 reference mirroring the PyTorch forward."""
    h1 = _leaky_relu(x @ w1.T + b1)
    h2 = _leaky_relu(h1 @ w2.T + b2)
    return jax.nn.sigmoid(h2 @ w3.T + b3)


if __name__ == "__main__":
    z_size, d = 32, 128

    key = jax.random.PRNGKey(0)
    kx, kx2, k1, k2, k3, kb1, kb2, kb3 = jax.random.split(key, 8)

    # normal_init-style weights (std=0.02); biases given small nonzero values
    # to exercise the packed-bias path (forward semantics are init-agnostic).
    std = 0.02
    w1 = std * jax.random.normal(k1, (d, z_size), dtype=jnp.float32)
    w2 = std * jax.random.normal(k2, (d, d), dtype=jnp.float32)
    w3 = std * jax.random.normal(k3, (1, d), dtype=jnp.float32)
    b1 = 0.01 * jax.random.normal(kb1, (d,), dtype=jnp.float32)
    b2 = 0.01 * jax.random.normal(kb2, (d,), dtype=jnp.float32)
    b3 = 0.01 * jax.random.normal(kb3, (1,), dtype=jnp.float32)

    # One-time parameter prep (transpose + bf16 cast + packing), not per call.
    w1t, w2t, small = prepare_params(w1, b1, w2, b2, w3, b3)

    # Case 1: module-sized small batch (single-tile grid).
    x_small = jax.random.normal(kx, (8, z_size), dtype=jnp.float32)
    out_small = jax.block_until_ready(zdiscriminator(x_small, w1t, w2t, small))
    ref_small = zdiscriminator_ref(x_small, w1, b1, w2, b2, w3, b3)
    assert out_small.shape == (8, 1), out_small.shape
    assert jnp.allclose(out_small, ref_small, atol=2e-3, rtol=0), (
        out_small, ref_small)

    # Case 2: non-multiple batch exercising the batch grid + padding path
    # (Bt=256, padded to 512, grid of 2 parallel steps).
    x_big = jax.random.normal(kx2, (300, z_size), dtype=jnp.float32)
    out_big = jax.block_until_ready(zdiscriminator(x_big, w1t, w2t, small))
    ref_big = zdiscriminator_ref(x_big, w1, b1, w2, b2, w3, b3)
    assert out_big.shape == (300, 1), out_big.shape
    assert jnp.allclose(out_big, ref_big, atol=2e-3, rtol=0), (out_big, ref_big)

    print("KERNEL_OK")
</pallas_src>

<mosaic_0001>
module attributes {stable_mosaic.version = 11 : i64} {
  func.func @zdisc_kernel(%arg0: i32, %arg1: memref<8x32xf32, #tpu.memory_space<vmem>>, %arg2: memref<32x128xbf16, #tpu.memory_space<vmem>>, %arg3: memref<128x128xbf16, #tpu.memory_space<vmem>>, %arg4: memref<4x128xf32, #tpu.memory_space<vmem>>, %arg5: memref<1x8xf32, #tpu.memory_space<vmem>>) attributes {dimension_semantics = [#tpu.dimension_semantics<parallel>], iteration_bounds = array<i64: 1>, scalar_prefetch = 0 : i64, scratch_operands = 0 : i64, tpu.core_type = #tpu.core_type<tc>, window_params = [{transform_indices = @transform_0, window_bounds = array<i64: 8, 32>}, {pipeline_mode = #tpu.pipeline_mode<synchronous>, transform_indices = @transform_1, window_bounds = array<i64: 32, 128>}, {pipeline_mode = #tpu.pipeline_mode<synchronous>, transform_indices = @transform_2, window_bounds = array<i64: 128, 128>}, {pipeline_mode = #tpu.pipeline_mode<synchronous>, transform_indices = @transform_3, window_bounds = array<i64: 4, 128>}, {transform_indices = @transform_4, window_bounds = array<i64: 1, 8>}]} {
    %c0 = arith.constant 0 : index
    %c0_0 = arith.constant 0 : index
    %0 = vector.load %arg1[%c0, %c0_0] : memref<8x32xf32, #tpu.memory_space<vmem>>, vector<8x32xf32>
    %1 = arith.truncf %0 : vector<8x32xf32> to vector<8x32xbf16>
    %c0_1 = arith.constant 0 : index
    %c0_2 = arith.constant 0 : index
    %2 = vector.load %arg4[%c0_1, %c0_2] : memref<4x128xf32, #tpu.memory_space<vmem>>, vector<1x128xf32>
    %c1 = arith.constant 1 : index
    %c0_3 = arith.constant 0 : index
    %3 = vector.load %arg4[%c1, %c0_3] : memref<4x128xf32, #tpu.memory_space<vmem>>, vector<1x128xf32>
    %c2 = arith.constant 2 : index
    %c0_4 = arith.constant 0 : index
    %4 = vector.load %arg4[%c2, %c0_4] : memref<4x128xf32, #tpu.memory_space<vmem>>, vector<1x128xf32>
    %5 = arith.truncf %4 : vector<1x128xf32> to vector<1x128xbf16>
    %c3 = arith.constant 3 : index
    %c0_5 = arith.constant 0 : index
    %6 = vector.load %arg4[%c3, %c0_5] : memref<4x128xf32, #tpu.memory_space<vmem>>, vector<1x1xf32>
    %c0_6 = arith.constant 0 : index
    %c0_7 = arith.constant 0 : index
    %7 = vector.load %arg2[%c0_6, %c0_7] : memref<32x128xbf16, #tpu.memory_space<vmem>>, vector<32x128xbf16>
    %cst = arith.constant dense<0.000000e+00> : vector<8x128xf32>
    %8 = tpu.matmul %1, %7, %cst {dimension_numbers = #tpu.dot_dimension_numbers<[1], [0], [0], [1], [0, 0, 1, 1], [], []>} : vector<8x32xbf16>, vector<32x128xbf16>, vector<8x128xf32> -> vector<8x128xf32>
    %9 = vector.broadcast %2 : vector<1x128xf32> to vector<8x128xf32>
    %10 = arith.addf %8, %9 : vector<8x128xf32>
    %cst_8 = arith.constant 0.000000e+00 : f32
    %11 = vector.broadcast %cst_8 : f32 to vector<8x128xf32>
    %12 = arith.cmpf ogt, %10, %11 : vector<8x128xf32>
    %cst_9 = arith.constant 2.000000e-01 : f32
    %13 = vector.broadcast %cst_9 : f32 to vector<8x128xf32>
    %14 = arith.mulf %13, %10 : vector<8x128xf32>
    %15 = arith.select %12, %10, %14 : vector<8x128xi1>, vector<8x128xf32>
    %16 = arith.truncf %15 : vector<8x128xf32> to vector<8x128xbf16>
    %c0_10 = arith.constant 0 : index
    %c0_11 = arith.constant 0 : index
    %17 = vector.load %arg3[%c0_10, %c0_11] : memref<128x128xbf16, #tpu.memory_space<vmem>>, vector<128x128xbf16>
    %cst_12 = arith.constant dense<0.000000e+00> : vector<8x128xf32>
    %18 = tpu.matmul %16, %17, %cst_12 {dimension_numbers = #tpu.dot_dimension_numbers<[1], [0], [0], [1], [0, 0, 1, 1], [], []>} : vector<8x128xbf16>, vector<128x128xbf16>, vector<8x128xf32> -> vector<8x128xf32>
    %19 = vector.broadcast %3 : vector<1x128xf32> to vector<8x128xf32>
    %20 = arith.addf %18, %19 : vector<8x128xf32>
    %cst_13 = arith.constant 0.000000e+00 : f32
    %21 = vector.broadcast %cst_13 : f32 to vector<8x128xf32>
    %22 = arith.cmpf ogt, %20, %21 : vector<8x128xf32>
    %cst_14 = arith.constant 2.000000e-01 : f32
    %23 = vector.broadcast %cst_14 : f32 to vector<8x128xf32>
    %24 = arith.mulf %23, %20 : vector<8x128xf32>
    %25 = arith.select %22, %20, %24 : vector<8x128xi1>, vector<8x128xf32>
    %26 = arith.truncf %25 : vector<8x128xf32> to vector<8x128xbf16>
    %cst_15 = arith.constant dense<0.000000e+00> : vector<1x8xf32>
    %27 = tpu.matmul %5, %26, %cst_15 {dimension_numbers = #tpu.dot_dimension_numbers<[1], [1], [0], [0], [0, 0, 1, 0], [], []>} : vector<1x128xbf16>, vector<8x128xbf16>, vector<1x8xf32> -> vector<1x8xf32>
    %28 = vector.broadcast %6 : vector<1x1xf32> to vector<1x8xf32>
    %29 = arith.addf %27, %28 : vector<1x8xf32>
    %30 = arith.negf %29 : vector<1x8xf32>
    %31 = math.exp %30 : vector<1x8xf32>
    %cst_16 = arith.constant 1.000000e+00 : f32
    %32 = vector.broadcast %cst_16 : f32 to vector<1x8xf32>
    %33 = arith.addf %32, %31 : vector<1x8xf32>
    %34 = arith.divf %32, %33 : vector<1x8xf32>
    %c0_17 = arith.constant 0 : index
    %c0_18 = arith.constant 0 : index
    %35 = vector.load %arg5[%c0_17, %c0_18] : memref<1x8xf32, #tpu.memory_space<vmem>>, vector<1x8xf32>
    tpu.vector_store %arg5[%c0_17, %c0_18], %34 {strides = array<i32>} : memref<1x8xf32, #tpu.memory_space<vmem>>, vector<1x8xf32>,
    return
  }
  func.func @transform_0(%arg0: i32) -> (i32, i32) {
    %c0_i32 = arith.constant 0 : i32
    %c0_i32_0 = arith.constant 0 : i32
    return %arg0, %c0_i32 : i32, i32
  }
  func.func @transform_1(%arg0: i32) -> (i32, i32) {
    %c0_i32 = arith.constant 0 : i32
    %c0_i32_0 = arith.constant 0 : i32
    %c0_i32_1 = arith.constant 0 : i32
    return %c0_i32, %c0_i32_0 : i32, i32
  }
  func.func @transform_2(%arg0: i32) -> (i32, i32) {
    %c0_i32 = arith.constant 0 : i32
    %c0_i32_0 = arith.constant 0 : i32
    %c0_i32_1 = arith.constant 0 : i32
    return %c0_i32, %c0_i32_0 : i32, i32
  }
  func.func @transform_3(%arg0: i32) -> (i32, i32) {
    %c0_i32 = arith.constant 0 : i32
    %c0_i32_0 = arith.constant 0 : i32
    %c0_i32_1 = arith.constant 0 : i32
    return %c0_i32, %c0_i32_0 : i32, i32
  }
  func.func @transform_4(%arg0: i32) -> (i32, i32) {
    %c0_i32 = arith.constant 0 : i32
    %c0_i32_0 = arith.constant 0 : i32
    return %c0_i32, %arg0 : i32, i32
  }
}

</mosaic_0001>

<llo_original>
// kernel: tpu_custom_call.1
$region0: #{tpu_custom_call.1}
  #allocation0 [shape = 'u32[]', space=smem, size = 0x4, offset = 0x4, fixed_abs, tag = 'smem constant byte address 0x4 - core index']
  #allocation1 [shape = 'u32[72,128]{1,0:T(1,128)}', space=vmem, size = 0x9000, scoped, tag = 'internal scratch']
  %s0 = inlined_call_operand.hbm [shape: f32[8,32], index: 0, kind: input, shape index: {}]
  %s1 = inlined_call_operand.hbm [shape: bf16[32,128], index: 1, kind: input, shape index: {}]
  %s2 = inlined_call_operand.hbm [shape: bf16[128,128], index: 2, kind: input, shape index: {}]
  %s3 = inlined_call_operand.hbm [shape: f32[4,128], index: 3, kind: input, shape index: {}]
  %s4 = inlined_call_operand.hbm [shape: f32[1,8], index: 4, kind: output, shape index: {}]
  %s5 = sld [smem:[#allocation0]]
  $region42: #{tpu_custom_call.1} parent=0
    _
  %s7 = ssub.s32 1, %s5
  %s8 = scalar_select 0, %s7, %s5
  $region1: #{tpu_custom_call.1} parent=0
    #allocation2 [shape = 'u8[4096]{0}', space=vmem, size = 0x1000, scoped, tag = 'input window, operand 0, single buffered']
    #allocation3 [shape = 's32[1]{0}', space=sflag, size = 0x4, scoped, tag = 'scoped memory for tpu_custom_call.1']
    #allocation4 [shape = 's32[1]{0}', space=sflag, size = 0x4, scoped, tag = 'scoped memory for tpu_custom_call.1']
    #allocation5 [shape = 'u8[8192]{0}', space=vmem, size = 0x2000, scoped, tag = 'input window, operand 1, single buffered']
    #allocation6 [shape = 's32[1]{0}', space=sflag, size = 0x4, scoped, tag = 'scoped memory for tpu_custom_call.1']
    #allocation7 [shape = 'u8[32768]{0}', space=vmem, size = 0x8000, scoped, tag = 'input window, operand 2, single buffered']
    #allocation8 [shape = 'u8[2048]{0}', space=vmem, size = 0x800, scoped, tag = 'input window, operand 3, single buffered']
    #allocation9 [shape = 's32[1]{0}', space=sflag, size = 0x4, scoped, tag = 'scoped memory for tpu_custom_call.1']
    #allocation10 [shape = 'u8[512]{0}', space=vmem, size = 0x400, scoped, tag = 'output window, operand 0, single buffered']
    %9 = vsyncpa [#allocation3], 0
    %10 = vsyncpa [#allocation6], 0
    %11 = vsyncpa [#allocation9], 0
    %12 = vsyncpa [#allocation4], 0
    // Predicated region
    $region2: #{tpu_custom_call.1} parent=1 // pred_check
      _
    $region3: #{tpu_custom_call.1} parent=1 // pred_check_branch
      %14 = sbr.rel (0) target = $region5
    $region4: #{tpu_custom_call.1} parent=1 // pred_region
      %16 = vsyncadd [#allocation3], 0
      %s18 = sshll.u32 %s0, 4
      %s19 = int_to_ptr.hbm [resolvable:$true] %s18
      %s20 = sshll.u32 [#allocation2], 4
      %s21 = int_to_ptr.vmem [resolvable:$true] %s20
      %23 = dma.hbm_to_vmem [thread:$0]  %s19, 128, %s21, [#allocation3]
    $region5: #{tpu_custom_call.1} parent=1 // pred_fallthru
      _
    // Predicated region
    $region6: #{tpu_custom_call.1} parent=1 // pred_check
      _
    $region7: #{tpu_custom_call.1} parent=1 // pred_check_branch
      %25 = sbr.rel (0) target = $region9
    $region8: #{tpu_custom_call.1} parent=1 // pred_region
      %27 = vsyncadd [#allocation6], 0
      %s28 = sshll.u32 %s1, 4
      %s29 = int_to_ptr.hbm [resolvable:$true] %s28
      %s30 = sshll.u32 [#allocation5], 4
      %s31 = int_to_ptr.vmem [resolvable:$true] %s30
      %36 = dma.hbm_to_vmem [thread:$0]  %s29, 256, %s31, [#allocation6], 64, 64, 4
    $region9: #{tpu_custom_call.1} parent=1 // pred_fallthru
      _
    // Predicated region
    $region10: #{tpu_custom_call.1} parent=1 // pred_check
      _
    $region11: #{tpu_custom_call.1} parent=1 // pred_check_branch
      %38 = sbr.rel (0) target = $region13
    $region12: #{tpu_custom_call.1} parent=1 // pred_region
      %40 = vsyncadd [#allocation6], 0
      %s41 = sshll.u32 %s2, 4
      %s42 = int_to_ptr.hbm [resolvable:$true] %s41
      %s43 = sshll.u32 [#allocation7], 4
      %s44 = int_to_ptr.vmem [resolvable:$true] %s43
      %49 = dma.hbm_to_vmem [thread:$0]  %s42, 1024, %s44, [#allocation6], 64, 64, 4
    $region13: #{tpu_custom_call.1} parent=1 // pred_fallthru
      _
    // Predicated region
    $region14: #{tpu_custom_call.1} parent=1 // pred_check
      _
    $region15: #{tpu_custom_call.1} parent=1 // pred_check_branch
      %51 = sbr.rel (0) target = $region17
    $region16: #{tpu_custom_call.1} parent=1 // pred_region
      %53 = vsyncadd [#allocation9], 0
      %s55 = sshll.u32 %s3, 4
      %s56 = int_to_ptr.hbm [resolvable:$true] %s55
      %s57 = sshll.u32 [#allocation8], 4
      %s58 = int_to_ptr.vmem [resolvable:$true] %s57
      %60 = dma.hbm_to_vmem [thread:$0]  %s56, 64, %s58, [#allocation9]
    $region17: #{tpu_custom_call.1} parent=1 // pred_fallthru
      _
    // Predicated region
    $region18: #{tpu_custom_call.1} parent=1 // pred_check
      _
    $region19: #{tpu_custom_call.1} parent=1 // pred_check_branch
      %62 = sbr.rel (0) target = $region21
    $region20: #{tpu_custom_call.1} parent=1 // pred_region
      %64 = dma.done [#allocation3], 128
    $region21: #{tpu_custom_call.1} parent=1 // pred_fallthru
      _
    // Predicated region
    $region22: #{tpu_custom_call.1} parent=1 // pred_check
      _
    $region23: #{tpu_custom_call.1} parent=1 // pred_check_branch
      %66 = sbr.rel (0) target = $region25
    $region24: #{tpu_custom_call.1} parent=1 // pred_region
      %68 = dma.done [#allocation6], 256
    $region25: #{tpu_custom_call.1} parent=1 // pred_fallthru
      _
    // Predicated region
    $region26: #{tpu_custom_call.1} parent=1 // pred_check
      _
    $region27: #{tpu_custom_call.1} parent=1 // pred_check_branch
      %70 = sbr.rel (0) target = $region29
    $region28: #{tpu_custom_call.1} parent=1 // pred_region
      %72 = dma.done [#allocation6], 1024
    $region29: #{tpu_custom_call.1} parent=1 // pred_fallthru
      _
    // Predicated region
    $region30: #{tpu_custom_call.1} parent=1 // pred_check
      _
    $region31: #{tpu_custom_call.1} parent=1 // pred_check_branch
      %74 = sbr.rel (0) target = $region33
    $region32: #{tpu_custom_call.1} parent=1 // pred_region
      %76 = dma.done [#allocation9], 64
    $region33: #{tpu_custom_call.1} parent=1 // pred_fallthru
      _
    %v78 = vld [vmem:[#allocation2] sm:$0xff]
    %v79 = vpack.c.bf16 %v78, %v78
    %v80 = vld [vmem:[#allocation8] sm:$0x1]
    %v81 = vld [vmem:[#allocation8 + $0x1] sm:$0x1]
    %v82 = vld [vmem:[#allocation8 + $0x2] sm:$0x1]
    %v83 = vpack.c.bf16 %v82, %v82
    %v84 = vld [vmem:[#allocation8 + $0x3] sm:$0x1]
    %v85 = vld [vmem:[#allocation5] sm:$0xf]
    %v86 = vld [vmem:[#allocation5 + $0x4] sm:$0xf]
    %v87 = vld [vmem:[#allocation5 + $0x8] sm:$0xf]
    %v88 = vld [vmem:[#allocation5 + $0xc] sm:$0xf]
    %v89 = vperm.slane %v80, 0
    %v94 = vunpack.c.l.b16 %v85
    %v95 = vunpack.c.l.b16 %v86
    %v96 = vunpack.c.l.b16 %v87
    %v97 = vunpack.c.l.b16 %v88
    %v98 = vpack.c.b16 %v95, %v94
    %v99 = vpack.c.b16 %v97, %v96
    %vm102 = vcmask 261120
    %v104 = vsel %vm102, %v79, 0
    %106 = vmatpush.bf16.msra.mxu0 0
    %107 = vmatpush.bf16.msra.mxu0 0
    %108 = vmatpush.bf16.msra.mxu0 0
    %109 = vmatpush.bf16.msra.mxu0 0
    %110 = vmatpush.bf16.msra.mxu0 0
    %111 = vmatpush.bf16.msra.mxu0 0
    %112 = vmatpush.bf16.msra.mxu0 %v99
    %113 = vmatpush.bf16.msra.mxu0 %v98
    %114 = vmatmul.bf16.gmra.mxu0 %v104
    %v115 = vpop.f32.mrf.mxu0
    %v116 = vadd.f32 %v89, %v115
    %v117 = vpop.f32.mrf.mxu0
    %118 = vdwg.mxu0
    %vm119 = vcmp.gt.f32.partialorder %v116, 0.0
    %v120 = vmul.f32 %v116, 0.2
    %v121 = vsel %vm119, %v116, %v120
    %v122 = vpack.c.bf16 %v121, %v121
    %v123 = vld [vmem:[#allocation7] sm:$0xf]
    %v124 = vld [vmem:[#allocation7 + $0x4] sm:$0xf]
    %v125 = vld [vmem:[#allocation7 + $0x8] sm:$0xf]
    %v126 = vld [vmem:[#allocation7 + $0xc] sm:$0xf]
    %v127 = vld [vmem:[#allocation7 + $0x10] sm:$0xf]
    %v128 = vld [vmem:[#allocation7 + $0x14] sm:$0xf]
    %v129 = vld [vmem:[#allocation7 + $0x18] sm:$0xf]
    %v130 = vld [vmem:[#allocation7 + $0x1c] sm:$0xf]
    %v131 = vld [vmem:[#allocation7 + $0x20] sm:$0xf]
    %v132 = vld [vmem:[#allocation7 + $0x24] sm:$0xf]
    %v133 = vld [vmem:[#allocation7 + $0x28] sm:$0xf]
    %v134 = vld [vmem:[#allocation7 + $0x2c] sm:$0xf]
    %v135 = vld [vmem:[#allocation7 + $0x30] sm:$0xf]
    %v136 = vld [vmem:[#allocation7 + $0x34] sm:$0xf]
    %v137 = vld [vmem:[#allocation7 + $0x38] sm:$0xf]
    %v138 = vld [vmem:[#allocation7 + $0x3c] sm:$0xf]
    %v139 = vperm.slane %v81, 0
    %v156 = vunpack.c.l.b16 %v123
    %v157 = vunpack.c.l.b16 %v124
    %v158 = vunpack.c.l.b16 %v125
    %v159 = vunpack.c.l.b16 %v126
    %v160 = vunpack.c.l.b16 %v127
    %v161 = vunpack.c.l.b16 %v128
    %v162 = vunpack.c.l.b16 %v129
    %v163 = vunpack.c.l.b16 %v130
    %v164 = vunpack.c.l.b16 %v131
    %v165 = vunpack.c.l.b16 %v132
    %v166 = vunpack.c.l.b16 %v133
    %v167 = vunpack.c.l.b16 %v134
    %v168 = vunpack.c.l.b16 %v135
    %v169 = vunpack.c.l.b16 %v136
    %v170 = vunpack.c.l.b16 %v137
    %v171 = vunpack.c.l.b16 %v138
    %v172 = vpack.c.b16 %v157, %v156
    %v173 = vpack.c.b16 %v159, %v158
    %v174 = vpack.c.b16 %v161, %v160
    %v175 = vpack.c.b16 %v163, %v162
    %v176 = vpack.c.b16 %v165, %v164
    %v177 = vpack.c.b16 %v167, %v166
    %v178 = vpack.c.b16 %v169, %v168
    %v179 = vpack.c.b16 %v171, %v170
    %188 = vmatpush.bf16.msra.mxu0 %v179
    %189 = vmatpush.bf16.msra.mxu0 %v178
    %190 = vmatpush.bf16.msra.mxu0 %v177
    %191 = vmatpush.bf16.msra.mxu0 %v176
    %192 = vmatpush.bf16.msra.mxu0 %v175
    %193 = vmatpush.bf16.msra.mxu0 %v174
    %194 = vmatpush.bf16.msra.mxu0 %v173
    %195 = vmatpush.bf16.msra.mxu0 %v172
    %196 = vmatmul.bf16.gmra.mxu0 %v122
    %v197 = vpop.f32.mrf.mxu0
    %v198 = vadd.f32 %v139, %v197
    %v199 = vpop.f32.mrf.mxu0
    %200 = vdwg.mxu0
    %vm201 = vcmp.gt.f32.partialorder %v198, 0.0
    %v202 = vmul.f32 %v198, 0.2
    %v203 = vsel %vm201, %v198, %v202
    %v204 = vpack.c.bf16 %v203, %v203
    %206 = vset.pattern.permute.xlu0 0
    %207 = vperm.xlu0 %206, %v84
    %v208 = vpop.permute.xlu0 %207
    %210 = vmatpush.bf16.xpose.msra.mxu0 0
    %211 = vmatpush.bf16.xpose.msra.mxu0 0
    %212 = vmatpush.bf16.xpose.msra.mxu0 0
    %213 = vmatpush.bf16.xpose.msra.mxu0 0
    %214 = vmatpush.bf16.xpose.msra.mxu0 0
    %215 = vmatpush.bf16.xpose.msra.mxu0 0
    %216 = vmatpush.bf16.xpose.msra.mxu0 0
    %217 = vmatpush.bf16.xpose.msra.mxu0 %v204
    %218 = vmatmul.bf16.gmra.mxu0 %v83
    %v219 = vpop.f32.mrf.mxu0
    %v220 = vadd.f32 %v208, %v219
    %v221 = vpop.f32.mrf.mxu0
    %222 = vdwg.mxu0
    %v223 = vxor.u32 %v220, 2147483648
    %v224 = vmul.f32 %v223, 1.442695
    %v225 = vpow.pop %v224
    %v226 = vadd.f32 %v225, 1.0
    %v227 = vrcp.pop %v226
    %v228 = vmul.f32 %v226, %v227
    %v229 = vsub.f32 1.0, %v228
    %v230 = vmul.f32 %v227, %v229
    %v231 = vadd.f32 %v227, %v230
    %vm232 = vweird.f32 %v226
    %vm233 = vweird.f32 %v227
    %vm234 = vmor %vm232, %vm233
    %v235 = vsel %vm234, %v227, %v231
    %v236 = vand.u32 2147483647, %v226
    %vm237 = vcmp.eq.f32.partialorder %v236, 8.507059e+37
    %v238 = vand.u32 %v226, 2147483648
    %v239 = vor.u32 1.1754944e-38, %v238
    %v240 = vsel %vm237, %v239, %v235
    %v241 = vmul.f32 1.0, %v240
    %vm242 = vcmask 57344
    %243 = vst.msk [vmem:[#allocation10] sm:$0x1] %vm242, %v241
    // Predicated region
    $region34: #{tpu_custom_call.1} parent=1 // pred_check
      _
    $region35: #{tpu_custom_call.1} parent=1 // pred_check_branch
      %245 = sbr.rel (0) target = $region37
    $region36: #{tpu_custom_call.1} parent=1 // pred_region
      %247 = vsyncadd [#allocation4], 0
      %s249 = sshll.u32 [#allocation10], 4
      %s250 = int_to_ptr.vmem [resolvable:$true] %s249
      %s251 = sshll.u32 %s4, 4
      %s252 = int_to_ptr.hbm [resolvable:$true] %s251
      %254 = dma.vmem_to_hbm [thread:$0]  %s250, 16, %s252, [#allocation4]
    $region37: #{tpu_custom_call.1} parent=1 // pred_fallthru
      _
    // Predicated region
    $region38: #{tpu_custom_call.1} parent=1 // pred_check
      _
    $region39: #{tpu_custom_call.1} parent=1 // pred_check_branch
      %256 = sbr.rel (0) target = $region41
    $region40: #{tpu_custom_call.1} parent=1 // pred_region
      %258 = dma.done [#allocation4], 16
    $region41: #{tpu_custom_call.1} parent=1 // pred_fallthru
      _
    %259 = vsyncpa [#allocation3], 1
    %260 = vsyncpa [#allocation6], 1
    %261 = vsyncpa [#allocation9], 1
    %262 = vsyncpa [#allocation4], 1

</llo_original>
